<compile_context>
chip_gen: v5e
topology: v5e:2x2
jax: 0.10.0
libtpu: 0.0.40
codegen_flags: <defaults>
</compile_context>

<pallas_src>
import functools
import math

import jax
import jax.numpy as jnp
from jax.experimental import pallas as pl
from jax.experimental.pallas import tpu as pltpu


_INV_SQRT2 = 1.0 / math.sqrt(2.0)


def _activation(h, kind):
    """Activation in f32. kind in {'relu', 'gelu', 'gelu_new'}."""
    if kind == "relu":
        return jnp.maximum(h, 0.0)
    if kind == "gelu":
        # Exact erf GELU (torch.nn.GELU default).
        return 0.5 * h * (1.0 + jax.lax.erf(h * _INV_SQRT2))
    if kind == "gelu_new":
        # Tanh approximation (curated_transformers GeluNew); EUP-friendly.
        return jax.nn.gelu(h, approximate=True)
    raise ValueError(f"unsupported activation function '{kind}'")


def _ffn_kernel_fused(x_ref, w1_ref, b1_ref, w2_ref, b2_ref, o_ref, *, act):
    # Full W1/W2 resident in VMEM; single fused pass per row tile.
    h = jnp.dot(x_ref[...], w1_ref[...], preferred_element_type=jnp.float32)
    h = _activation(h + b1_ref[...].astype(jnp.float32), act)
    out = jnp.dot(h.astype(w2_ref.dtype), w2_ref[...],
                  preferred_element_type=jnp.float32)
    o_ref[...] = (out + b2_ref[...].astype(jnp.float32)).astype(o_ref.dtype)


def _ffn_kernel_streamed(x_ref, w1_ref, b1_ref, w2_ref, b2_ref, o_ref,
                         acc_ref, *, act):
    # Grid: (row tiles, intermediate tiles); axis 1 is the reduction axis.
    k = pl.program_id(1)

    @pl.when(k == 0)
    def _():
        acc_ref[...] = jnp.zeros_like(acc_ref)

    # (tm, H) @ (H, ti) -> (tm, ti); native-dtype MXU inputs, f32 accumulate.
    h = jnp.dot(x_ref[...], w1_ref[...], preferred_element_type=jnp.float32)
    h = _activation(h + b1_ref[...].astype(jnp.float32), act)

    acc_ref[...] += jnp.dot(h.astype(w2_ref.dtype), w2_ref[...],
                            preferred_element_type=jnp.float32)

    @pl.when(k == pl.num_programs(1) - 1)
    def _():
        o_ref[...] = (acc_ref[...]
                      + b2_ref[...].astype(jnp.float32)).astype(o_ref.dtype)


def _round_up(a, b):
    return ((a + b - 1) // b) * b


def _vmem_capacity_bytes():
    try:
        info = pltpu.get_tpu_info()
        cap = getattr(info, "vmem_capacity_bytes", None)
        if cap:
            return int(cap)
    except Exception:
        pass
    return 64 << 20  # conservative fallback (v7x per-TC)


def bert_feed_forward(x, w1, b1, w2, b2, *, tm=None, ti=None, act="gelu"):
    """x: (batch, seq, hidden); w1: (H, I); b1: (I,); w2: (I, H); b2: (H,)."""
    batch, seq, hidden = x.shape
    inter = w1.shape[1]
    m = batch * seq

    x_sz = jnp.dtype(x.dtype).itemsize
    w_sz = jnp.dtype(w1.dtype).itemsize
    row_align = 8 if x_sz >= 4 else 16

    vmem_cap = _vmem_capacity_bytes()
    budget = int(vmem_cap * 0.85)   # headroom for compiler-internal scratch

    # ---- Row tile: big enough to amortize weight traffic; >=2 tiles when
    # there is enough work so v7x's 2 TensorCores both get rows.
    if tm is None:
        tm = 512 if x_sz >= 4 else 1024
    m_rounded = _round_up(m, row_align)
    if m_rounded > tm:
        tm_eff = _round_up(tm, row_align)
    elif m_rounded >= 256:
        tm_eff = _round_up(pl.cdiv(m, 2), row_align)
    else:
        tm_eff = m_rounded

    def io_bytes(t_m):
        # Double-buffered x and out row tiles.
        return 4 * t_m * hidden * x_sz

    # ---- Full-weight residency (preferred when it fits in VMEM) ----------
    resident_bytes = (io_bytes(tm_eff)
                      + 2 * (hidden * inter + inter * hidden
                             + 8 * inter + 8 * hidden) * w_sz
                      + tm_eff * inter * 4)       # f32 activation temp
    use_fused = (ti is None) and (resident_bytes <= budget)

    if use_fused:
        ti_eff = inter
        i_pad = inter
        footprint = resident_bytes
    else:
        if ti is None:
            ti = 1024
        ti_eff = min(ti, inter)
        if ti_eff >= 128:
            ti_eff = (ti_eff // 128) * 128   # lane-aligned W1 column slices
        else:
            ti_eff = inter                   # tiny I: single full block

        def streamed_bytes(t_m, t_i):
            return (io_bytes(t_m)
                    + t_m * hidden * 4                         # f32 accumulator
                    + 2 * (hidden * t_i + t_i * hidden
                           + 8 * t_i + 8 * hidden) * w_sz      # W1/b1/W2/b2 tiles
                    + t_m * t_i * 4)                           # f32 activation temp

        while ti_eff > 128 and streamed_bytes(tm_eff, ti_eff) > budget:
            ti_eff = max(128, ((ti_eff // 2) // 128) * 128)
        while tm_eff > 8 * row_align and streamed_bytes(tm_eff, ti_eff) > budget:
            tm_eff = _round_up(max(tm_eff // 2, row_align), row_align)

        i_pad = _round_up(inter, ti_eff)
        footprint = streamed_bytes(tm_eff, ti_eff)

    m_pad = _round_up(m, tm_eff)

    # ---- Wrapper-side padding --------------------------------------------
    x2d = x.reshape(m, hidden)
    if m_pad != m:
        x2d = jnp.pad(x2d, ((0, m_pad - m), (0, 0)))
    if i_pad != inter:
        # Zero-padding I is exact: act(0 + 0) = 0 for relu/gelu, and zero rows
        # of W2 contribute nothing to the output.
        w1 = jnp.pad(w1, ((0, 0), (0, i_pad - inter)))
        b1 = jnp.pad(b1, ((0, i_pad - inter),))
        w2 = jnp.pad(w2, ((0, i_pad - inter), (0, 0)))
    b1_2d = b1.reshape(1, i_pad)
    b2_2d = b2.reshape(1, hidden)

    vmem_limit = int(min(vmem_cap, max(footprint + (8 << 20), 32 << 20)))

    if use_fused:
        kernel = functools.partial(_ffn_kernel_fused, act=act)
        out2d = pl.pallas_call(
            kernel,
            out_shape=jax.ShapeDtypeStruct((m_pad, hidden), x.dtype),
            grid_spec=pltpu.PrefetchScalarGridSpec(
                num_scalar_prefetch=0,
                grid=(m_pad // tm_eff,),
                in_specs=[
                    pl.BlockSpec((tm_eff, hidden), lambda i: (i, 0)),   # x rows
                    pl.BlockSpec((hidden, i_pad), lambda i: (0, 0)),    # W1 (resident)
                    pl.BlockSpec((1, i_pad), lambda i: (0, 0)),         # b1
                    pl.BlockSpec((i_pad, hidden), lambda i: (0, 0)),    # W2 (resident)
                    pl.BlockSpec((1, hidden), lambda i: (0, 0)),        # b2
                ],
                out_specs=pl.BlockSpec((tm_eff, hidden), lambda i: (i, 0)),
            ),
            compiler_params=pltpu.CompilerParams(
                dimension_semantics=("parallel",),
                vmem_limit_bytes=vmem_limit,
            ),
        )(x2d, w1, b1_2d, w2, b2_2d)
    else:
        kernel = functools.partial(_ffn_kernel_streamed, act=act)
        out2d = pl.pallas_call(
            kernel,
            out_shape=jax.ShapeDtypeStruct((m_pad, hidden), x.dtype),
            grid_spec=pltpu.PrefetchScalarGridSpec(
                num_scalar_prefetch=0,
                grid=(m_pad // tm_eff, i_pad // ti_eff),
                in_specs=[
                    pl.BlockSpec((tm_eff, hidden), lambda i, k: (i, 0)),  # x rows
                    pl.BlockSpec((hidden, ti_eff), lambda i, k: (0, k)),  # W1 slice
                    pl.BlockSpec((1, ti_eff), lambda i, k: (0, k)),       # b1 slice
                    pl.BlockSpec((ti_eff, hidden), lambda i, k: (k, 0)),  # W2 slice
                    pl.BlockSpec((1, hidden), lambda i, k: (0, 0)),       # b2
                ],
                out_specs=pl.BlockSpec((tm_eff, hidden), lambda i, k: (i, 0)),
                scratch_shapes=[pltpu.VMEM((tm_eff, hidden), jnp.float32)],
            ),
            compiler_params=pltpu.CompilerParams(
                dimension_semantics=("parallel", "arbitrary"),
                vmem_limit_bytes=vmem_limit,
            ),
        )(x2d, w1, b1_2d, w2, b2_2d)

    if m_pad != m:
        out2d = out2d[:m]
    return out2d.reshape(batch, seq, hidden)


# ---------------------------------------------------------------------------
# Reference + tests
# ---------------------------------------------------------------------------

def _reference(x, w1, b1, w2, b2, act="gelu"):
    h = jnp.einsum("bsh,hi->bsi", x.astype(jnp.float32),
                   w1.astype(jnp.float32)) + b1.astype(jnp.float32)
    h = _activation(h, act)
    out = jnp.einsum("bsi,ih->bsh", h, w2.astype(jnp.float32)) + b2.astype(jnp.float32)
    return out.astype(x.dtype)


def _make_params(key, hidden, inter, dtype):
    k1, k2, k3, k4 = jax.random.split(key, 4)
    lim1 = 1.0 / math.sqrt(hidden)
    lim2 = 1.0 / math.sqrt(inter)
    w1 = jax.random.uniform(k1, (hidden, inter), dtype, -lim1, lim1)
    b1 = jax.random.uniform(k2, (inter,), dtype, -lim1, lim1)
    w2 = jax.random.uniform(k3, (inter, hidden), dtype, -lim2, lim2)
    b2 = jax.random.uniform(k4, (hidden,), dtype, -lim2, lim2)
    return w1, b1, w2, b2


if __name__ == "__main__":
    key = jax.random.PRNGKey(0)

    # --- Test 1: toy config (hidden=32, intermediate=128, gelu) ------------
    # Exercises the full-weight-residency fused path.
    batch, seq, hidden, inter = 2, 8, 32, 128
    kx, kp = jax.random.split(key)
    x = jax.random.normal(kx, (batch, seq, hidden), dtype=jnp.float32)
    w1, b1, w2, b2 = _make_params(kp, hidden, inter, jnp.float32)

    out = bert_feed_forward(x, w1, b1, w2, b2)
    jax.block_until_ready(out)
    ref = _reference(x, w1, b1, w2, b2)
    assert out.shape == (batch, seq, hidden)
    assert jnp.allclose(out, ref, atol=1e-4, rtol=1e-4)

    # --- Test 2: streamed path, row padding + reduction tiling -------------
    batch2, seq2, hidden2, inter2 = 2, 7, 128, 256
    kx2, kp2 = jax.random.split(jax.random.PRNGKey(1))
    x2 = jax.random.normal(kx2, (batch2, seq2, hidden2), dtype=jnp.float32)
    p2 = _make_params(kp2, hidden2, inter2, jnp.float32)

    out2 = bert_feed_forward(x2, *p2, tm=16, ti=128)   # grid (1, 2), pad 14->16
    jax.block_until_ready(out2)
    ref2 = _reference(x2, *p2)
    assert out2.shape == (batch2, seq2, hidden2)
    assert jnp.allclose(out2, ref2, atol=1e-4, rtol=1e-4)

    # --- Test 3: streamed path with intermediate-dim zero-padding ----------
    batch3, seq3, hidden3, inter3 = 1, 24, 128, 192    # 192 -> padded to 256
    kx3, kp3 = jax.random.split(jax.random.PRNGKey(2))
    x3 = jax.random.normal(kx3, (batch3, seq3, hidden3), dtype=jnp.float32)
    p3 = _make_params(kp3, hidden3, inter3, jnp.float32)

    out3 = bert_feed_forward(x3, *p3, tm=8, ti=128)    # grid (3, 2)
    jax.block_until_ready(out3)
    ref3 = _reference(x3, *p3)
    assert out3.shape == (batch3, seq3, hidden3)
    assert jnp.allclose(out3, ref3, atol=1e-4, rtol=1e-4)

    # --- Test 4: relu activation branch (module also supports it) ----------
    out4 = bert_feed_forward(x, w1, b1, w2, b2, act="relu")
    jax.block_until_ready(out4)
    ref4 = _reference(x, w1, b1, w2, b2, act="relu")
    assert jnp.allclose(out4, ref4, atol=1e-4, rtol=1e-4)

    print("KERNEL_OK")
</pallas_src>

<mosaic_0001>
module attributes {stable_mosaic.version = 11 : i64} {
  func.func @_ffn_kernel_fused(%arg0: i32, %arg1: memref<16x32xf32, #tpu.memory_space<vmem>>, %arg2: memref<32x128xf32, #tpu.memory_space<vmem>>, %arg3: memref<1x128xf32, #tpu.memory_space<vmem>>, %arg4: memref<128x32xf32, #tpu.memory_space<vmem>>, %arg5: memref<1x32xf32, #tpu.memory_space<vmem>>, %arg6: memref<16x32xf32, #tpu.memory_space<vmem>>) attributes {dimension_semantics = [#tpu.dimension_semantics<parallel>], iteration_bounds = array<i64: 1>, scalar_prefetch = 0 : i64, scratch_operands = 0 : i64, tpu.core_type = #tpu.core_type<tc>, window_params = [{transform_indices = @transform_0, window_bounds = array<i64: 16, 32>}, {pipeline_mode = #tpu.pipeline_mode<synchronous>, transform_indices = @transform_1, window_bounds = array<i64: 32, 128>}, {pipeline_mode = #tpu.pipeline_mode<synchronous>, transform_indices = @transform_2, window_bounds = array<i64: 1, 128>}, {pipeline_mode = #tpu.pipeline_mode<synchronous>, transform_indices = @transform_3, window_bounds = array<i64: 128, 32>}, {pipeline_mode = #tpu.pipeline_mode<synchronous>, transform_indices = @transform_4, window_bounds = array<i64: 1, 32>}, {transform_indices = @transform_5, window_bounds = array<i64: 16, 32>}]} {
    %c0 = arith.constant 0 : index
    %c0_0 = arith.constant 0 : index
    %0 = vector.load %arg1[%c0, %c0_0] : memref<16x32xf32, #tpu.memory_space<vmem>>, vector<16x32xf32>
    %c0_1 = arith.constant 0 : index
    %c0_2 = arith.constant 0 : index
    %1 = vector.load %arg2[%c0_1, %c0_2] : memref<32x128xf32, #tpu.memory_space<vmem>>, vector<32x128xf32>
    %cst = arith.constant dense<0.000000e+00> : vector<16x128xf32>
    %2 = tpu.matmul %0, %1, %cst {dimension_numbers = #tpu.dot_dimension_numbers<[1], [0], [0], [1], [0, 0, 1, 1], [], []>} : vector<16x32xf32>, vector<32x128xf32>, vector<16x128xf32> -> vector<16x128xf32>
    %c0_3 = arith.constant 0 : index
    %c0_4 = arith.constant 0 : index
    %3 = vector.load %arg3[%c0_3, %c0_4] : memref<1x128xf32, #tpu.memory_space<vmem>>, vector<1x128xf32>
    %4 = vector.broadcast %3 : vector<1x128xf32> to vector<16x128xf32>
    %5 = arith.addf %2, %4 : vector<16x128xf32>
    %cst_5 = arith.constant 5.000000e-01 : f32
    %6 = vector.broadcast %cst_5 : f32 to vector<16x128xf32>
    %7 = arith.mulf %6, %5 : vector<16x128xf32>
    %cst_6 = arith.constant 0.707106769 : f32
    %8 = vector.broadcast %cst_6 : f32 to vector<16x128xf32>
    %9 = arith.mulf %5, %8 : vector<16x128xf32>
    %10 = math.erf %9 : vector<16x128xf32>
    %cst_7 = arith.constant 1.000000e+00 : f32
    %11 = vector.broadcast %cst_7 : f32 to vector<16x128xf32>
    %12 = arith.addf %11, %10 : vector<16x128xf32>
    %13 = arith.mulf %7, %12 : vector<16x128xf32>
    %c0_8 = arith.constant 0 : index
    %c0_9 = arith.constant 0 : index
    %14 = vector.load %arg4[%c0_8, %c0_9] : memref<128x32xf32, #tpu.memory_space<vmem>>, vector<128x32xf32>
    %cst_10 = arith.constant dense<0.000000e+00> : vector<16x32xf32>
    %15 = tpu.matmul %13, %14, %cst_10 {dimension_numbers = #tpu.dot_dimension_numbers<[1], [0], [0], [1], [0, 0, 1, 1], [], []>} : vector<16x128xf32>, vector<128x32xf32>, vector<16x32xf32> -> vector<16x32xf32>
    %c0_11 = arith.constant 0 : index
    %c0_12 = arith.constant 0 : index
    %16 = vector.load %arg5[%c0_11, %c0_12] : memref<1x32xf32, #tpu.memory_space<vmem>>, vector<1x32xf32>
    %17 = vector.broadcast %16 : vector<1x32xf32> to vector<16x32xf32>
    %18 = arith.addf %15, %17 : vector<16x32xf32>
    %c0_13 = arith.constant 0 : index
    %c0_14 = arith.constant 0 : index
    %19 = vector.load %arg6[%c0_13, %c0_14] : memref<16x32xf32, #tpu.memory_space<vmem>>, vector<16x32xf32>
    tpu.vector_store %arg6[%c0_13, %c0_14], %18 {strides = array<i32>} : memref<16x32xf32, #tpu.memory_space<vmem>>, vector<16x32xf32>,
    return
  }
  func.func @transform_0(%arg0: i32) -> (i32, i32) {
    %c0_i32 = arith.constant 0 : i32
    %c0_i32_0 = arith.constant 0 : i32
    return %arg0, %c0_i32 : i32, i32
  }
  func.func @transform_1(%arg0: i32) -> (i32, i32) {
    %c0_i32 = arith.constant 0 : i32
    %c0_i32_0 = arith.constant 0 : i32
    %c0_i32_1 = arith.constant 0 : i32
    return %c0_i32, %c0_i32_0 : i32, i32
  }
  func.func @transform_2(%arg0: i32) -> (i32, i32) {
    %c0_i32 = arith.constant 0 : i32
    %c0_i32_0 = arith.constant 0 : i32
    %c0_i32_1 = arith.constant 0 : i32
    return %c0_i32, %c0_i32_0 : i32, i32
  }
  func.func @transform_3(%arg0: i32) -> (i32, i32) {
    %c0_i32 = arith.constant 0 : i32
    %c0_i32_0 = arith.constant 0 : i32
    %c0_i32_1 = arith.constant 0 : i32
    return %c0_i32, %c0_i32_0 : i32, i32
  }
  func.func @transform_4(%arg0: i32) -> (i32, i32) {
    %c0_i32 = arith.constant 0 : i32
    %c0_i32_0 = arith.constant 0 : i32
    %c0_i32_1 = arith.constant 0 : i32
    return %c0_i32, %c0_i32_0 : i32, i32
  }
  func.func @transform_5(%arg0: i32) -> (i32, i32) {
    %c0_i32 = arith.constant 0 : i32
    %c0_i32_0 = arith.constant 0 : i32
    return %arg0, %c0_i32 : i32, i32
  }
}

</mosaic_0001>

<llo_original>
// kernel: tpu_custom_call.1
$region0: #{tpu_custom_call.1}
  #allocation0 [shape = 'u32[]', space=smem, size = 0x4, offset = 0x4, fixed_abs, tag = 'smem constant byte address 0x4 - core index']
  #allocation1 [shape = 'u32[72,128]{1,0:T(1,128)}', space=vmem, size = 0x9000, scoped, tag = 'internal scratch']
  %s0 = inlined_call_operand.vmem [shape: f32[16,32], index: 0, kind: input, shape index: {}]
  %s1 = inlined_call_operand.vmem [shape: f32[32,128], index: 1, kind: input, shape index: {}]
  %s2 = inlined_call_operand.vmem [shape: f32[1,128], index: 2, kind: input, shape index: {}]
  %s3 = inlined_call_operand.vmem [shape: f32[128,32], index: 3, kind: input, shape index: {}]
  %s4 = inlined_call_operand.vmem [shape: f32[1,32], index: 4, kind: input, shape index: {}]
  %s5 = inlined_call_operand.hbm [shape: f32[16,32], index: 5, kind: output, shape index: {}]
  %s6 = sld [smem:[#allocation0]]
  $region30: #{tpu_custom_call.1} parent=0
    _
  %s8 = ssub.s32 1, %s6
  %s9 = scalar_select 0, %s8, %s6
  $region1: #{tpu_custom_call.1} parent=0
    #allocation2 [shape = 'u8[8192]{0}', space=vmem, size = 0x2000, scoped, tag = 'output window, operand 0, single buffered']
    #allocation3 [shape = 's32[1]{0}', space=sflag, size = 0x4, scoped, tag = 'scoped memory for tpu_custom_call.1']
    %10 = vsyncpa [#allocation3], 0
    // Predicated region
    $region2: #{tpu_custom_call.1} parent=1 // pred_check
      _
    $region3: #{tpu_custom_call.1} parent=1 // pred_check_branch
      %12 = sbr.rel (0) target = $region5
    $region4: #{tpu_custom_call.1} parent=1 // pred_region
      _
    $region5: #{tpu_custom_call.1} parent=1 // pred_fallthru
      _
    // Predicated region
    $region6: #{tpu_custom_call.1} parent=1 // pred_check
      _
    $region7: #{tpu_custom_call.1} parent=1 // pred_check_branch
      %14 = sbr.rel (0) target = $region9
    $region8: #{tpu_custom_call.1} parent=1 // pred_region
      _
    $region9: #{tpu_custom_call.1} parent=1 // pred_fallthru
      _
    // Predicated region
    $region10: #{tpu_custom_call.1} parent=1 // pred_check
      _
    $region11: #{tpu_custom_call.1} parent=1 // pred_check_branch
      %16 = sbr.rel (0) target = $region13
    $region12: #{tpu_custom_call.1} parent=1 // pred_region
      _
    $region13: #{tpu_custom_call.1} parent=1 // pred_fallthru
      _
    // Predicated region
    $region14: #{tpu_custom_call.1} parent=1 // pred_check
      _
    $region15: #{tpu_custom_call.1} parent=1 // pred_check_branch
      %18 = sbr.rel (0) target = $region17
    $region16: #{tpu_custom_call.1} parent=1 // pred_region
      _
    $region17: #{tpu_custom_call.1} parent=1 // pred_fallthru
      _
    // Predicated region
    $region18: #{tpu_custom_call.1} parent=1 // pred_check
      _
    $region19: #{tpu_custom_call.1} parent=1 // pred_check_branch
      %20 = sbr.rel (0) target = $region21
    $region20: #{tpu_custom_call.1} parent=1 // pred_region
      _
    $region21: #{tpu_custom_call.1} parent=1 // pred_fallthru
      _
    %v21 = vld [vmem:[%s0] sm:$0xff]
    %v22 = vld [vmem:[%s0 + $0x8] sm:$0xff]
    %v23 = vld [vmem:[%s1] sm:$0xff]
    %v24 = vld [vmem:[%s1 + $0x8] sm:$0xff]
    %v25 = vld [vmem:[%s1 + $0x10] sm:$0xff]
    %v26 = vld [vmem:[%s1 + $0x18] sm:$0xff]
    %v27 = vld [vmem:[%s2] sm:$0x1]
    %v29 = vperm.slane %v27, 0
    %vm31 = vcmask 261120
    %v33 = vsel %vm31, %v21, 0
    %v36 = vsel %vm31, %v22, 0
    %38 = vmatpush.msra.mxu0 0.0
    %39 = vmatpush.msra.mxu0 0.0
    %40 = vmatpush.msra.mxu0 0.0
    %41 = vmatpush.msra.mxu0 0.0
    %42 = vmatpush.msra.mxu0 0.0
    %43 = vmatpush.msra.mxu0 0.0
    %44 = vmatpush.msra.mxu0 0.0
    %45 = vmatpush.msra.mxu0 0.0
    %46 = vmatpush.msra.mxu0 0.0
    %47 = vmatpush.msra.mxu0 0.0
    %48 = vmatpush.msra.mxu0 0.0
    %49 = vmatpush.msra.mxu0 0.0
    %50 = vmatpush.msra.mxu0 %v26
    %51 = vmatpush.msra.mxu0 %v25
    %52 = vmatpush.msra.mxu0 %v24
    %53 = vmatpush.msra.mxu0 %v23
    %54 = vmatmul.f32.gmra.mxu0 %v33
    %v55 = vpop.f32.mrf.mxu0
    %v56 = vadd.f32 %v29, %v55
    %57 = vmatmul.f32.gmra.mxu0 %v36
    %v58 = vpop.f32.mrf.mxu0
    %v59 = vadd.f32 %v29, %v58
    %60 = vdwg.mxu0
    %v61 = vmul.f32 %v56, 0.5
    %v62 = vmul.f32 %v59, 0.5
    %v63 = vmul.f32 %v56, 0.70710677
    %v64 = vmul.f32 %v59, 0.70710677
    %v65 = vmul.f32 %v63, %v63
    %v66 = vmin.f32 16.0, %v65
    %v67 = vmul.f32 %v66, 2.1237322e-06
    %v68 = vadd.f32 %v67, 0.00028619796
    %v69 = vmul.f32 %v66, %v68
    %v70 = vadd.f32 %v69, 0.0036580483
    %v71 = vmul.f32 %v66, %v70
    %v72 = vadd.f32 %v71, 0.05243302
    %v73 = vmul.f32 %v66, %v72
    %v74 = vadd.f32 %v73, 0.18741608
    %v75 = vmul.f32 %v66, %v74
    %v76 = vadd.f32 %v75, 1.1283791
    %v77 = vmul.f32 %v63, %v76
    %v78 = vmul.f32 %v66, 3.8918573e-05
    %v79 = vadd.f32 %v78, 0.001143296
    %v80 = vmul.f32 %v66, %v79
    %v81 = vadd.f32 %v80, 0.014752088
    %v82 = vmul.f32 %v66, %v81
    %v83 = vadd.f32 %v82, 0.112945676
    %v84 = vmul.f32 %v66, %v83
    %v85 = vadd.f32 %v84, 0.4994258
    %v86 = vmul.f32 %v66, %v85
    %v87 = vadd.f32 %v86, 1.0
    %v88 = vrcp.pop %v87
    %v89 = vmul.f32 %v87, %v88
    %v90 = vsub.f32 1.0, %v89
    %v91 = vmul.f32 %v88, %v90
    %v92 = vadd.f32 %v88, %v91
    %vm93 = vweird.f32 %v87
    %vm94 = vweird.f32 %v88
    %vm95 = vmor %vm93, %vm94
    %v96 = vsel %vm95, %v88, %v92
    %v97 = vand.u32 2147483647, %v87
    %vm98 = vcmp.eq.f32.partialorder %v97, 8.507059e+37
    %v99 = vand.u32 %v87, 2147483648
    %v100 = vor.u32 1.1754944e-38, %v99
    %v101 = vsel %vm98, %v100, %v96
    %v102 = vmul.f32 %v77, %v101
    %v103 = vmin.f32 %v102, 1.0
    %v104 = vmax.f32 %v103, -1.0
    %v105 = vmul.f32 %v64, %v64
    %v106 = vmin.f32 16.0, %v105
    %v107 = vmul.f32 %v106, 2.1237322e-06
    %v108 = vadd.f32 %v107, 0.00028619796
    %v109 = vmul.f32 %v106, %v108
    %v110 = vadd.f32 %v109, 0.0036580483
    %v111 = vmul.f32 %v106, %v110
    %v112 = vadd.f32 %v111, 0.05243302
    %v113 = vmul.f32 %v106, %v112
    %v114 = vadd.f32 %v113, 0.18741608
    %v115 = vmul.f32 %v106, %v114
    %v116 = vadd.f32 %v115, 1.1283791
    %v117 = vmul.f32 %v64, %v116
    %v118 = vmul.f32 %v106, 3.8918573e-05
    %v119 = vadd.f32 %v118, 0.001143296
    %v120 = vmul.f32 %v106, %v119
    %v121 = vadd.f32 %v120, 0.014752088
    %v122 = vmul.f32 %v106, %v121
    %v123 = vadd.f32 %v122, 0.112945676
    %v124 = vmul.f32 %v106, %v123
    %v125 = vadd.f32 %v124, 0.4994258
    %v126 = vmul.f32 %v106, %v125
    %v127 = vadd.f32 %v126, 1.0
    %v128 = vrcp.pop %v127
    %v129 = vmul.f32 %v127, %v128
    %v130 = vsub.f32 1.0, %v129
    %v131 = vmul.f32 %v128, %v130
    %v132 = vadd.f32 %v128, %v131
    %vm133 = vweird.f32 %v127
    %vm134 = vweird.f32 %v128
    %vm135 = vmor %vm133, %vm134
    %v136 = vsel %vm135, %v128, %v132
    %v137 = vand.u32 2147483647, %v127
    %vm138 = vcmp.eq.f32.partialorder %v137, 8.507059e+37
    %v139 = vand.u32 %v127, 2147483648
    %v140 = vor.u32 1.1754944e-38, %v139
    %v141 = vsel %vm138, %v140, %v136
    %v142 = vmul.f32 %v117, %v141
    %v143 = vmin.f32 %v142, 1.0
    %v144 = vmax.f32 %v143, -1.0
    %v145 = vadd.f32 %v104, 1.0
    %v146 = vadd.f32 %v144, 1.0
    %v147 = vmul.f32 %v61, %v145
    %v148 = vmul.f32 %v62, %v146
    %v149 = vld [vmem:[%s3] sm:$0xff]
    %v150 = vld [vmem:[%s3 + $0x8] sm:$0xff]
    %v151 = vld [vmem:[%s3 + $0x10] sm:$0xff]
    %v152 = vld [vmem:[%s3 + $0x18] sm:$0xff]
    %v153 = vld [vmem:[%s3 + $0x20] sm:$0xff]
    %v154 = vld [vmem:[%s3 + $0x28] sm:$0xff]
    %v155 = vld [vmem:[%s3 + $0x30] sm:$0xff]
    %v156 = vld [vmem:[%s3 + $0x38] sm:$0xff]
    %v157 = vld [vmem:[%s3 + $0x40] sm:$0xff]
    %v158 = vld [vmem:[%s3 + $0x48] sm:$0xff]
    %v159 = vld [vmem:[%s3 + $0x50] sm:$0xff]
    %v160 = vld [vmem:[%s3 + $0x58] sm:$0xff]
    %v161 = vld [vmem:[%s3 + $0x60] sm:$0xff]
    %v162 = vld [vmem:[%s3 + $0x68] sm:$0xff]
    %v163 = vld [vmem:[%s3 + $0x70] sm:$0xff]
    %v164 = vld [vmem:[%s3 + $0x78] sm:$0xff]
    %v165 = vld [vmem:[%s4] sm:$0x1]
    %v167 = vperm.slane %v165, 0
    %169 = vmatpush.msra.mxu0 %v164
    %170 = vmatpush.msra.mxu0 %v163
    %171 = vmatpush.msra.mxu0 %v162
    %172 = vmatpush.msra.mxu0 %v161
    %173 = vmatpush.msra.mxu0 %v160
    %174 = vmatpush.msra.mxu0 %v159
    %175 = vmatpush.msra.mxu0 %v158
    %176 = vmatpush.msra.mxu0 %v157
    %177 = vmatpush.msra.mxu0 %v156
    %178 = vmatpush.msra.mxu0 %v155
    %179 = vmatpush.msra.mxu0 %v154
    %180 = vmatpush.msra.mxu0 %v153
    %181 = vmatpush.msra.mxu0 %v152
    %182 = vmatpush.msra.mxu0 %v151
    %183 = vmatpush.msra.mxu0 %v150
    %184 = vmatpush.msra.mxu0 %v149
    %185 = vmatmul.f32.gmra.mxu0 %v147
    %v186 = vpop.f32.mrf.mxu0
    %v187 = vadd.f32 %v167, %v186
    %188 = vmatmul.f32.gmra.mxu0 %v148
    %v189 = vpop.f32.mrf.mxu0
    %v190 = vadd.f32 %v167, %v189
    %191 = vdwg.mxu0
    %192 = vst.msk [vmem:[#allocation2] sm:$0xff] %vm31, %v187
    %193 = vst.msk [vmem:[#allocation2 + $0x8] sm:$0xff] %vm31, %v190
    // Predicated region
    $region22: #{tpu_custom_call.1} parent=1 // pred_check
      _
    $region23: #{tpu_custom_call.1} parent=1 // pred_check_branch
      %195 = sbr.rel (0) target = $region25
    $region24: #{tpu_custom_call.1} parent=1 // pred_region
      %197 = vsyncadd [#allocation3], 0
      %s198 = sshll.u32 [#allocation2], 4
      %s199 = int_to_ptr.vmem [resolvable:$true] %s198
      %s200 = sshll.u32 %s5, 4
      %s201 = int_to_ptr.hbm [resolvable:$true] %s200
      %206 = dma.vmem_to_hbm [thread:$0]  %s199, 256, %s201, [#allocation3], 128, 128, 8
    $region25: #{tpu_custom_call.1} parent=1 // pred_fallthru
      _
    // Predicated region
    $region26: #{tpu_custom_call.1} parent=1 // pred_check
      _
    $region27: #{tpu_custom_call.1} parent=1 // pred_check_branch
      %208 = sbr.rel (0) target = $region29
    $region28: #{tpu_custom_call.1} parent=1 // pred_region
      %210 = dma.done [#allocation3], 256
    $region29: #{tpu_custom_call.1} parent=1 // pred_fallthru
      _
    %211 = vsyncpa [#allocation3], 1

</llo_original>
